<compile_context>
chip_gen: v5e
topology: v5e:2x2
jax: 0.10.0
libtpu: 0.0.40
codegen_flags: <defaults>
</compile_context>

<pallas_src>
import jax
import jax.numpy as jnp
import numpy as np
from jax.experimental import pallas as pl
from jax.experimental.pallas import tpu as pltpu


def _cdiv(a, b):
    return (a + b - 1) // b


def _round_up(v, m):
    return ((v + m - 1) // m) * m


def plda_forward(x, ulda, log_norm_scale, *, tm=1024, bf16_matmul=False):
    """x: (N, D) f32, ulda: (D, D) f32, log_norm_scale: (1,) f32 -> (y, z) each (N, D)."""
    N, D = x.shape
    assert ulda.shape == (D, D)

    # ---- Row tile selection (no padding of N or D) -------------------------------
    if N <= 8:
        TM = N                                     # single full-dim row block
    else:
        # >= 2 grid steps so the "parallel" row axis shards across both v7x TCs.
        TM = min(tm, _round_up(_cdiv(N, 2), 8))
        # Keep x/y/z streaming footprint (3 streams x 2 buffers x f32) under ~24 MiB.
        while TM > 256 and 24 * TM * D > (24 << 20):
            TM //= 2
        TM = _round_up(TM, 8)
    grid = (_cdiv(N, TM),)

    # VMEM budget: 3 double-buffered (TM, D) streams + Ulda (assume 2 bufs for the
    # fallback path) + slack.  Clamp to [32 MiB, 64 MiB] (64 MiB = v7x physical).
    est = 4 * (6 * TM * D + 2 * D * D) + (2 << 20)
    vmem_limit = int(min(64 << 20, max(32 << 20, est)))

    cost = pl.CostEstimate(
        flops=2 * N * D * D,
        transcendentals=N,                         # one rsqrt per row
        bytes_accessed=4 * (3 * N * D + D * D),
    )

    def kernel(log_scale_ref, x_ref, ulda_ref, y_ref, z_ref):
        # log_scale_ref: SMEM (1,) f32
        # x_ref: (TM, D) VMEM; ulda_ref: (D, D) VMEM (resident across grid steps)
        x_t = x_ref[...]

        # length_norm: clamp log scale at 0, exponentiate, L2-normalize rows.
        norm_scale = jnp.exp(jnp.maximum(log_scale_ref[0], 0.0))
        sq_norm = jnp.sum(x_t * x_t, axis=1, keepdims=True)          # (TM, 1)
        # eps^2 = 1e-24 inside the max  <=>  max(||x||, 1e-12) of F.normalize
        inv_norm = jax.lax.rsqrt(jnp.maximum(sq_norm, 1e-24))        # EUP slot
        y_ref[...] = ((norm_scale * inv_norm) * x_t).astype(y_ref.dtype)

        # z = y @ Ulda  (MXU, f32 accumulate); read y back from the output buffer
        # to avoid keeping a second live (TM, D) intermediate.
        y_t = y_ref[...]
        u_t = ulda_ref[...]
        if bf16_matmul:  # optional v5e large-D path; relaxes z tolerance
            y_t = y_t.astype(jnp.bfloat16)
            u_t = u_t.astype(jnp.bfloat16)
        z_ref[...] = jnp.dot(y_t, u_t,
                             preferred_element_type=jnp.float32).astype(z_ref.dtype)

    def call(ulda_spec):
        return pl.pallas_call(
            kernel,
            grid=grid,
            out_shape=(
                jax.ShapeDtypeStruct((N, D), x.dtype),
                jax.ShapeDtypeStruct((N, D), x.dtype),
            ),
            in_specs=[
                pl.BlockSpec(memory_space=pltpu.SMEM),           # log_norm_scale scalar
                pl.BlockSpec((TM, D), lambda i: (i, 0)),         # x row tile (ragged last)
                ulda_spec,                                       # Ulda, VMEM-resident
            ],
            out_specs=(
                pl.BlockSpec((TM, D), lambda i: (i, 0)),         # y row tile
                pl.BlockSpec((TM, D), lambda i: (i, 0)),         # z row tile
            ),
            compiler_params=pltpu.CompilerParams(
                dimension_semantics=("parallel",),
                vmem_limit_bytes=vmem_limit,
            ),
            cost_estimate=cost,
        )(log_norm_scale, x, ulda)

    try:
        # Single-buffered Ulda (constant index_map -> fetched once; halves its VMEM).
        return call(pl.BlockSpec((D, D), lambda i: (0, 0),
                                 pipeline_mode=pl.Buffered(1)))
    except Exception:
        # Fallback for environments without Buffered(1) support on auto-pipelined specs.
        return call(pl.BlockSpec((D, D), lambda i: (0, 0)))


def _reference(x, ulda, log_norm_scale):
    norm_scale = jnp.exp(jnp.maximum(log_norm_scale[0], 0.0))
    y = norm_scale * x / jnp.maximum(jnp.linalg.norm(x, axis=1, keepdims=True), 1e-12)
    return y, y @ ulda


if __name__ == "__main__":
    key = jax.random.PRNGKey(0)

    # Case 1: the module's nominal small config (even row split -> 2 grid steps).
    embedding_dim = 64
    batch = 16
    Ulda = jnp.eye(embedding_dim, dtype=jnp.float32)
    log_norm_scale = jnp.array([0.5 * np.log(float(embedding_dim))], dtype=jnp.float32)
    k1, k2 = jax.random.split(key)
    x = jax.random.normal(k1, (batch, embedding_dim), dtype=jnp.float32)

    y, z = plda_forward(x, Ulda, log_norm_scale)
    jax.block_until_ready((y, z))
    y_ref, z_ref = _reference(x, Ulda, log_norm_scale)
    assert np.allclose(np.asarray(y), np.asarray(y_ref), atol=1e-5, rtol=1e-5)
    assert np.allclose(np.asarray(z), np.asarray(z_ref), atol=1e-5, rtol=1e-5)

    # Case 2: ragged rows + non-multiple-of-128 embedding dim (exercises the clipped
    # last tile and full-dim D blocks; no padding anywhere).
    D2, N2 = 96, 13
    U2 = jax.random.normal(k2, (D2, D2), dtype=jnp.float32) / np.sqrt(D2)
    lns2 = jnp.array([0.5 * np.log(float(D2))], dtype=jnp.float32)
    x2 = jax.random.normal(jax.random.fold_in(key, 7), (N2, D2), dtype=jnp.float32)

    y2, z2 = plda_forward(x2, U2, lns2)
    jax.block_until_ready((y2, z2))
    y2_ref, z2_ref = _reference(x2, U2, lns2)
    assert np.allclose(np.asarray(y2), np.asarray(y2_ref), atol=1e-5, rtol=1e-5)
    assert np.allclose(np.asarray(z2), np.asarray(z2_ref), atol=1e-5, rtol=1e-5)

    print("KERNEL_OK")
</pallas_src>

<mosaic_0001>
module attributes {stable_mosaic.version = 11 : i64} {
  func.func @kernel(%arg0: i32, %arg1: memref<1xf32, #tpu.memory_space<smem>>, %arg2: memref<8x64xf32, #tpu.memory_space<vmem>>, %arg3: memref<64x64xf32, #tpu.memory_space<vmem>>, %arg4: memref<8x64xf32, #tpu.memory_space<vmem>>, %arg5: memref<8x64xf32, #tpu.memory_space<vmem>>) attributes {dimension_semantics = [#tpu.dimension_semantics<parallel>], iteration_bounds = array<i64: 2>, scalar_prefetch = 0 : i64, scratch_operands = 0 : i64, tpu.core_type = #tpu.core_type<tc>, window_params = [{transform_indices = @transform_0, window_bounds = array<i64: 1>}, {transform_indices = @transform_1, window_bounds = array<i64: 8, 64>}, {pipeline_mode = #tpu.pipeline_mode<synchronous>, transform_indices = @transform_2, window_bounds = array<i64: 64, 64>}, {transform_indices = @transform_3, window_bounds = array<i64: 8, 64>}, {transform_indices = @transform_4, window_bounds = array<i64: 8, 64>}]} {
    %c0 = arith.constant 0 : index
    %c0_0 = arith.constant 0 : index
    %0 = vector.load %arg2[%c0, %c0_0] : memref<8x64xf32, #tpu.memory_space<vmem>>, vector<8x64xf32>
    %c0_1 = arith.constant 0 : index
    %1 = memref.load %arg1[%c0_1] : memref<1xf32, #tpu.memory_space<smem>>
    %cst = arith.constant 0.000000e+00 : f32
    %2 = arith.maximumf %1, %cst : f32
    %3 = math.exp %2 : f32
    %4 = arith.mulf %0, %0 : vector<8x64xf32>
    %cst_2 = arith.constant dense<0.000000e+00> : vector<8xf32>
    %5 = vector.multi_reduction <add>, %4, %cst_2 [1] : vector<8x64xf32> to vector<8xf32>
    %6 = vector.shape_cast %5 : vector<8xf32> to vector<8x1xf32>
    %cst_3 = arith.constant 1.000000e-24 : f32
    %7 = vector.broadcast %cst_3 : f32 to vector<8x1xf32>
    %8 = arith.maximumf %6, %7 : vector<8x1xf32>
    %9 = math.rsqrt %8 : vector<8x1xf32>
    %10 = vector.broadcast %3 : f32 to vector<8x1xf32>
    %11 = arith.mulf %10, %9 : vector<8x1xf32>
    %12 = vector.broadcast %11 : vector<8x1xf32> to vector<8x64xf32>
    %13 = arith.mulf %12, %0 : vector<8x64xf32>
    %c0_4 = arith.constant 0 : index
    %c0_5 = arith.constant 0 : index
    %14 = vector.load %arg4[%c0_4, %c0_5] : memref<8x64xf32, #tpu.memory_space<vmem>>, vector<8x64xf32>
    tpu.vector_store %arg4[%c0_4, %c0_5], %13 {strides = array<i32>} : memref<8x64xf32, #tpu.memory_space<vmem>>, vector<8x64xf32>,
    %c0_6 = arith.constant 0 : index
    %c0_7 = arith.constant 0 : index
    %15 = vector.load %arg4[%c0_6, %c0_7] : memref<8x64xf32, #tpu.memory_space<vmem>>, vector<8x64xf32>
    %c0_8 = arith.constant 0 : index
    %c0_9 = arith.constant 0 : index
    %16 = vector.load %arg3[%c0_8, %c0_9] : memref<64x64xf32, #tpu.memory_space<vmem>>, vector<64x64xf32>
    %cst_10 = arith.constant dense<0.000000e+00> : vector<8x64xf32>
    %17 = tpu.matmul %15, %16, %cst_10 {dimension_numbers = #tpu.dot_dimension_numbers<[1], [0], [0], [1], [0, 0, 1, 1], [], []>} : vector<8x64xf32>, vector<64x64xf32>, vector<8x64xf32> -> vector<8x64xf32>
    %c0_11 = arith.constant 0 : index
    %c0_12 = arith.constant 0 : index
    %18 = vector.load %arg5[%c0_11, %c0_12] : memref<8x64xf32, #tpu.memory_space<vmem>>, vector<8x64xf32>
    tpu.vector_store %arg5[%c0_11, %c0_12], %17 {strides = array<i32>} : memref<8x64xf32, #tpu.memory_space<vmem>>, vector<8x64xf32>,
    return
  }
  func.func @transform_0(%arg0: i32) -> i32 {
    %c0_i32 = arith.constant 0 : i32
    %c0_i32_0 = arith.constant 0 : i32
    return %c0_i32 : i32
  }
  func.func @transform_1(%arg0: i32) -> (i32, i32) {
    %c0_i32 = arith.constant 0 : i32
    %c0_i32_0 = arith.constant 0 : i32
    return %arg0, %c0_i32 : i32, i32
  }
  func.func @transform_2(%arg0: i32) -> (i32, i32) {
    %c0_i32 = arith.constant 0 : i32
    %c0_i32_0 = arith.constant 0 : i32
    %c0_i32_1 = arith.constant 0 : i32
    return %c0_i32, %c0_i32_0 : i32, i32
  }
  func.func @transform_3(%arg0: i32) -> (i32, i32) {
    %c0_i32 = arith.constant 0 : i32
    %c0_i32_0 = arith.constant 0 : i32
    return %arg0, %c0_i32 : i32, i32
  }
  func.func @transform_4(%arg0: i32) -> (i32, i32) {
    %c0_i32 = arith.constant 0 : i32
    %c0_i32_0 = arith.constant 0 : i32
    return %arg0, %c0_i32 : i32, i32
  }
}

module attributes {stable_mosaic.version = 11 : i64} {
  func.func @kernel(%arg0: i32, %arg1: memref<1xf32, #tpu.memory_space<smem>>, %arg2: memref<8x64xf32, #tpu.memory_space<vmem>>, %arg3: memref<64x64xf32, #tpu.memory_space<vmem>>, %arg4: memref<8x64xf32, #tpu.memory_space<vmem>>, %arg5: memref<8x64xf32, #tpu.memory_space<vmem>>) attributes {dimension_semantics = [#tpu.dimension_semantics<parallel>], iteration_bounds = array<i64: 2>, scalar_prefetch = 0 : i64, scratch_operands = 0 : i64, tpu.core_type = #tpu.core_type<tc>, window_params = [{transform_indices = @transform_0, window_bounds = array<i64: 1>}, {transform_indices = @transform_1, window_bounds = array<i64: 8, 64>}, {pipeline_mode = #tpu.pipeline_mode<synchronous>, transform_indices = @transform_2, window_bounds = array<i64: 64, 64>}, {transform_indices = @transform_3, window_bounds = array<i64: 8, 64>}, {transform_indices = @transform_4, window_bounds = array<i64: 8, 64>}]} {
    %c0 = arith.constant 0 : index
    %c0_0 = arith.constant 0 : index
    %0 = vector.load %arg2[%c0, %c0_0] : memref<8x64xf32, #tpu.memory_space<vmem>>, vector<8x64xf32>
    %c0_1 = arith.constant 0 : index
    %1 = memref.load %arg1[%c0_1] : memref<1xf32, #tpu.memory_space<smem>>
    %cst = arith.constant 0.000000e+00 : f32
    %2 = arith.maximumf %1, %cst : f32
    %3 = math.exp %2 : f32
    %4 = arith.mulf %0, %0 : vector<8x64xf32>
    %cst_2 = arith.constant dense<0.000000e+00> : vector<8xf32>
    %5 = vector.multi_reduction <add>, %4, %cst_2 [1] : vector<8x64xf32> to vector<8xf32>
    %6 = vector.shape_cast %5 : vector<8xf32> to vector<8x1xf32>
    %cst_3 = arith.constant 1.000000e-24 : f32
    %7 = vector.broadcast %cst_3 : f32 to vector<8x1xf32>
    %8 = arith.maximumf %6, %7 : vector<8x1xf32>
    %9 = math.rsqrt %8 : vector<8x1xf32>
    %10 = vector.broadcast %3 : f32 to vector<8x1xf32>
    %11 = arith.mulf %10, %9 : vector<8x1xf32>
    %12 = vector.broadcast %11 : vector<8x1xf32> to vector<8x64xf32>
    %13 = arith.mulf %12, %0 : vector<8x64xf32>
    %c0_4 = arith.constant 0 : index
    %c0_5 = arith.constant 0 : index
    %14 = vector.load %arg4[%c0_4, %c0_5] : memref<8x64xf32, #tpu.memory_space<vmem>>, vector<8x64xf32>
    tpu.vector_store %arg4[%c0_4, %c0_5], %13 {strides = array<i32>} : memref<8x64xf32, #tpu.memory_space<vmem>>, vector<8x64xf32>,
    %c0_6 = arith.constant 0 : index
    %c0_7 = arith.constant 0 : index
    %15 = vector.load %arg4[%c0_6, %c0_7] : memref<8x64xf32, #tpu.memory_space<vmem>>, vector<8x64xf32>
    %c0_8 = arith.constant 0 : index
    %c0_9 = arith.constant 0 : index
    %16 = vector.load %arg3[%c0_8, %c0_9] : memref<64x64xf32, #tpu.memory_space<vmem>>, vector<64x64xf32>
    %cst_10 = arith.constant dense<0.000000e+00> : vector<8x64xf32>
    %17 = tpu.matmul %15, %16, %cst_10 {dimension_numbers = #tpu.dot_dimension_numbers<[1], [0], [0], [1], [0, 0, 1, 1], [], []>} : vector<8x64xf32>, vector<64x64xf32>, vector<8x64xf32> -> vector<8x64xf32>
    %c0_11 = arith.constant 0 : index
    %c0_12 = arith.constant 0 : index
    %18 = vector.load %arg5[%c0_11, %c0_12] : memref<8x64xf32, #tpu.memory_space<vmem>>, vector<8x64xf32>
    tpu.vector_store %arg5[%c0_11, %c0_12], %17 {strides = array<i32>} : memref<8x64xf32, #tpu.memory_space<vmem>>, vector<8x64xf32>,
    return
  }
  func.func @transform_0(%arg0: i32) -> i32 {
    %c0_i32 = arith.constant 0 : i32
    %c0_i32_0 = arith.constant 0 : i32
    return %c0_i32 : i32
  }
  func.func @transform_1(%arg0: i32) -> (i32, i32) {
    %c0_i32 = arith.constant 0 : i32
    %c0_i32_0 = arith.constant 0 : i32
    return %arg0, %c0_i32 : i32, i32
  }
  func.func @transform_2(%arg0: i32) -> (i32, i32) {
    %c0_i32 = arith.constant 0 : i32
    %c0_i32_0 = arith.constant 0 : i32
    %c0_i32_1 = arith.constant 0 : i32
    return %c0_i32, %c0_i32_0 : i32, i32
  }
  func.func @transform_3(%arg0: i32) -> (i32, i32) {
    %c0_i32 = arith.constant 0 : i32
    %c0_i32_0 = arith.constant 0 : i32
    return %arg0, %c0_i32 : i32, i32
  }
  func.func @transform_4(%arg0: i32) -> (i32, i32) {
    %c0_i32 = arith.constant 0 : i32
    %c0_i32_0 = arith.constant 0 : i32
    return %arg0, %c0_i32 : i32, i32
  }
}

</mosaic_0001>

<llo_original>
// kernel: tpu_custom_call.1
$region0: #{tpu_custom_call.1}
  #allocation0 [shape = 'u32[]', space=smem, size = 0x4, offset = 0x4, fixed_abs, tag = 'smem constant byte address 0x4 - core index']
  #allocation1 [shape = 'u32[72,128]{1,0:T(1,128)}', space=vmem, size = 0x9000, scoped, tag = 'internal scratch']
  #allocation2 [shape = 'f32[1]{0:T(128)S(6)}', space=smem, size = 0x200, scoped, tag = 'scoped memory for tpu_custom_call.1']
  %s0 = inlined_call_operand.<no memory space> [shape: f32[1], index: 0, kind: input, shape index: {}]
  %s1 = inlined_call_operand.hbm [shape: f32[16,64], index: 1, kind: input, shape index: {}]
  %s2 = inlined_call_operand.hbm [shape: f32[64,64], index: 2, kind: input, shape index: {}]
  %s3 = inlined_call_operand.hbm [shape: f32[16,64], index: 3, kind: output, shape index: {0}]
  %s4 = inlined_call_operand.hbm [shape: f32[16,64], index: 4, kind: output, shape index: {1}]
  %5 = xla_tuple %s3, %s4
  %s6 = sld [smem:[#allocation0]]
  $region61: #{tpu_custom_call.1} parent=0
    _
  %s8 = ssub.s32 1, %s6
  %s9 = scalar_select 0, %s8, %s6
  %10 = sst [smem:[#allocation2]] %s0
  $region1: #{tpu_custom_call.1} parent=0
    #allocation3 [shape = 'u8[8192]{0}', space=vmem, size = 0x2000, scoped, tag = 'input window, operand 1']
    #allocation4 [shape = 's32[2]{0}', space=sflag, size = 0x8, scoped, tag = 'scoped memory for tpu_custom_call.1']
    #allocation5 [shape = 's32[2]{0}', space=sflag, size = 0x8, scoped, tag = 'scoped memory for tpu_custom_call.1']
    #allocation6 [shape = 'u8[32768]{0}', space=vmem, size = 0x8000, scoped, tag = 'input window, operand 2, single buffered']
    #allocation7 [shape = 's32[1]{0}', space=sflag, size = 0x4, scoped, tag = 'scoped memory for tpu_custom_call.1']
    #allocation8 [shape = 'u8[8192]{0}', space=vmem, size = 0x2000, scoped, tag = 'output window, operand 0']
    #allocation9 [shape = 'u8[8192]{0}', space=vmem, size = 0x2000, scoped, tag = 'output window, operand 1']
    #allocation10 [shape = 's32[2]{0}', space=sflag, size = 0x8, scoped, tag = 'scoped memory for tpu_custom_call.1']
    %11 = vsyncpa [#allocation4], 0
    %s12 = scalar_lea.sflag [#allocation4], 1
    %13 = vsyncpa %s12, 0
    %14 = vsyncpa [#allocation7], 0
    %15 = vsyncpa [#allocation5], 0
    %s16 = scalar_lea.sflag [#allocation5], 1
    %17 = vsyncpa %s16, 0
    %18 = vsyncpa [#allocation10], 0
    %s19 = scalar_lea.sflag [#allocation10], 1
    %20 = vsyncpa %s19, 0
    loop: start=0, step=1, limit=4
    $region2: #{tpu_custom_call.1} parent=1 // loop_pre_header
      _
    $region3: #{tpu_custom_call.1} parent=1 // loop_header
      %s22 = sphi 0, %s26
      %p23 = scmp.ge.s32.totalorder %s22, 4
      %s30 = sphi 0, %s30
      %s32 = sphi 0, %s30
      %s33 = sphi 0, %s32
      %s47 = sphi 0, %s33
      %s53 = sphi 0, %s55
      %s56 = sphi 0, %s53
      %s57 = sphi 0, %s56
      %s73 = sphi 0, %s57
      %s77 = sphi 0, %s77
      %s79 = sphi 0, %s77
      %s80 = sphi 0, %s79
      %s94 = sphi 0, %s80
      %s100 = sphi 0, %s102
      %s103 = sphi 0, %s100
      %s104 = sphi 0, %s103
      %s120 = sphi 0, %s104
      %s126 = sphi 0, %s128
      %s129 = sphi 0, %s126
      %s130 = sphi 0, %s129
      %s146 = sphi 0, %s130
    $region4: #{tpu_custom_call.1} parent=1 // loop_header_branch
      %25 = sbr.rel (%p23) target = $region8
    $region5: #{tpu_custom_call.1} parent=1 // loop_body
      %s27 = ssub.s32 %s22, 1
      %s28 = ssub.s32 %s22, 2
      %s29 = sadd.s32 %s22, 1
      %s31 = sadd.s32 %s30, 1
      %p34 = scmp.eq.s32.totalorder %s22, 1
      %p35 = scmp.ne.s32.totalorder %s30, %s32
      %p36 = scmp.eq.s32.totalorder %s22, 0
      %p37 = por %p35, %p36
      %p38 = scmp.ne.s32.totalorder %s30, %s32
      %p39 = scmp.eq.s32.totalorder %s27, 1
      %p40 = por %p38, %p39
      %p41 = scmp.ne.s32.totalorder %s32, %s33
      %p42 = scmp.eq.s32.totalorder %s27, 0
      %p43 = por %p41, %p42
      %p44 = scmp.ne.s32.totalorder %s32, %s33
      %p45 = scmp.eq.s32.totalorder %s28, 1
      %p46 = por %p44, %p45
      %p48 = scmp.ne.s32.totalorder %s33, %s47
      %p49 = scmp.eq.s32.totalorder %s28, 0
      %p50 = por %p48, %p49
      %s51 = ssub.s32 %s22, %s29
      %p52 = scmp.eq.s32.totalorder %s51, 0
      %s54 = sadd.s32 %s53, 1
      %s55 = scalar_select %p52, %s53, %s54
      %p58 = pneg %p52
      %p59 = scmp.eq.s32.totalorder %s22, 1
      %p60 = por %p58, %p59
      %p61 = scmp.ne.s32.totalorder %s53, %s56
      %p62 = scmp.eq.s32.totalorder %s22, 0
      %p63 = por %p61, %p62
      %p64 = scmp.ne.s32.totalorder %s53, %s56
      %p65 = scmp.eq.s32.totalorder %s27, 1
      %p66 = por %p64, %p65
      %p67 = scmp.ne.s32.totalorder %s56, %s57
      %p68 = scmp.eq.s32.totalorder %s27, 0
      %p69 = por %p67, %p68
      %p70 = scmp.ne.s32.totalorder %s56, %s57
      %p71 = scmp.eq.s32.totalorder %s28, 1
      %p72 = por %p70, %p71
      %p74 = scmp.ne.s32.totalorder %s57, %s73
      %p75 = scmp.eq.s32.totalorder %s28, 0
      %p76 = por %p74, %p75
      %s78 = sadd.s32 %s77, 1
      %p81 = scmp.eq.s32.totalorder %s22, 1
      %p82 = scmp.ne.s32.totalorder %s77, %s79
      %p83 = scmp.eq.s32.totalorder %s22, 0
      %p84 = por %p82, %p83
      %p85 = scmp.ne.s32.totalorder %s77, %s79
      %p86 = scmp.eq.s32.totalorder %s27, 1
      %p87 = por %p85, %p86
      %p88 = scmp.ne.s32.totalorder %s79, %s80
      %p89 = scmp.eq.s32.totalorder %s27, 0
      %p90 = por %p88, %p89
      %p91 = scmp.ne.s32.totalorder %s79, %s80
      %p92 = scmp.eq.s32.totalorder %s28, 1
      %p93 = por %p91, %p92
      %p95 = scmp.ne.s32.totalorder %s80, %s94
      %p96 = scmp.eq.s32.totalorder %s28, 0
      %p97 = por %p95, %p96
      %s98 = ssub.s32 %s22, %s29
      %p99 = scmp.eq.s32.totalorder %s98, 0
      %s101 = sadd.s32 %s100, 1
      %s102 = scalar_select %p99, %s100, %s101
      %p105 = pneg %p99
      %p106 = scmp.eq.s32.totalorder %s22, 1
      %p107 = por %p105, %p106
      %p108 = scmp.ne.s32.totalorder %s100, %s103
      %p109 = scmp.eq.s32.totalorder %s22, 0
      %p110 = por %p108, %p109
      %p111 = scmp.ne.s32.totalorder %s100, %s103
      %p112 = scmp.eq.s32.totalorder %s27, 1
      %p113 = por %p111, %p112
      %p114 = scmp.ne.s32.totalorder %s103, %s104
      %p115 = scmp.eq.s32.totalorder %s27, 0
      %p116 = por %p114, %p115
      %p117 = scmp.ne.s32.totalorder %s103, %s104
      %p118 = scmp.eq.s32.totalorder %s28, 1
      %p119 = por %p117, %p118
      %p121 = scmp.ne.s32.totalorder %s104, %s120
      %p122 = scmp.eq.s32.totalorder %s28, 0
      %p123 = por %p121, %p122
      %s124 = ssub.s32 %s22, %s29
      %p125 = scmp.eq.s32.totalorder %s124, 0
      %s127 = sadd.s32 %s126, 1
      %s128 = scalar_select %p125, %s126, %s127
      %p131 = pneg %p125
      %p132 = scmp.eq.s32.totalorder %s22, 1
      %p133 = por %p131, %p132
      %p134 = scmp.ne.s32.totalorder %s126, %s129
      %p135 = scmp.eq.s32.totalorder %s22, 0
      %p136 = por %p134, %p135
      %p137 = scmp.ne.s32.totalorder %s126, %s129
      %p138 = scmp.eq.s32.totalorder %s27, 1
      %p139 = por %p137, %p138
      %p140 = scmp.ne.s32.totalorder %s129, %s130
      %p141 = scmp.eq.s32.totalorder %s27, 0
      %p142 = por %p140, %p141
      %p143 = scmp.ne.s32.totalorder %s129, %s130
      %p144 = scmp.eq.s32.totalorder %s28, 1
      %p145 = por %p143, %p144
      %p147 = scmp.ne.s32.totalorder %s130, %s146
      %p148 = scmp.eq.s32.totalorder %s28, 0
      %p149 = por %p147, %p148
      %p150 = scmp.le.s32.totalorder 1, %s22
      %p151 = scmp.lt.s32.totalorder %s22, 3
      %p152 = pnand %p150, %p151
      %p153 = pneg %p152
      // Predicated region
      $region9: #{tpu_custom_call.1} parent=5 // pred_check
        _
      $region10: #{tpu_custom_call.1} parent=5 // pred_check_branch
        %155 = sbr.rel (%p152) target = $region12
      $region11: #{tpu_custom_call.1} parent=5 // pred_region
        %s156 = ssub.s32 %s22, 1
        // Predicated region
        $region13: #{tpu_custom_call.1} parent=11 // pred_check
          %p157 = pneg %p43
        $region14: #{tpu_custom_call.1} parent=11 // pred_check_branch
          %159 = sbr.rel (%p157) target = $region16
        $region15: #{tpu_custom_call.1} parent=11 // pred_region
          _
        $region16: #{tpu_custom_call.1} parent=11 // pred_fallthru
          _
        // Predicated region
        $region17: #{tpu_custom_call.1} parent=11 // pred_check
          %p160 = pneg %p90
        $region18: #{tpu_custom_call.1} parent=11 // pred_check_branch
          %162 = sbr.rel (%p160) target = $region20
        $region19: #{tpu_custom_call.1} parent=11 // pred_region
          %164 = vsyncadd [#allocation7], 0
          %s165 = sshll.u32 %s2, 4
          %s166 = int_to_ptr.hbm [resolvable:$true] %s165
          %s167 = sshll.u32 [#allocation6], 4
          %s168 = int_to_ptr.vmem [resolvable:$true] %s167
          %173 = dma.hbm_to_vmem [thread:$0]  %s166, 1024, %s168, [#allocation7], 128, 128, 8
        $region20: #{tpu_custom_call.1} parent=11 // pred_fallthru
          _
      $region12: #{tpu_custom_call.1} parent=5 // pred_fallthru
        _
      %p174 = scmp.lt.s32.totalorder %s22, 2
      // Predicated region
      $region21: #{tpu_custom_call.1} parent=5 // pred_check
        %p175 = pneg %p174
      $region22: #{tpu_custom_call.1} parent=5 // pred_check_branch
        %177 = sbr.rel (%p175) target = $region24
      $region23: #{tpu_custom_call.1} parent=5 // pred_region
        // Predicated region
        $region25: #{tpu_custom_call.1} parent=23 // pred_check
          %p178 = pneg %p63
        $region26: #{tpu_custom_call.1} parent=23 // pred_check_branch
          %180 = sbr.rel (%p178) target = $region28
        $region27: #{tpu_custom_call.1} parent=23 // pred_region
          %s181 = sand.u32 %s53, 1
          %s182 = scalar_lea.sflag [#allocation4], %s181
          %s183 = sand.u32 %s53, 1
          %s184 = smul.addr %s183, 8
          %s185 = scalar_lea.vmem [#allocation3], %s184
          %187 = vsyncadd %s182, 0
          %s188 = smul.addr %s22, 8
          %s189 = scalar_lea.hbm %s1, %s188
          %s191 = sshll.u32 %s189, 4
          %s192 = int_to_ptr.hbm [resolvable:$true] %s191
          %s193 = sshll.u32 %s185, 4
          %s194 = int_to_ptr.vmem [resolvable:$true] %s193
          %196 = dma.hbm_to_vmem [thread:$0]  %s192, 128, %s194, %s182
        $region28: #{tpu_custom_call.1} parent=23 // pred_fallthru
          _
      $region24: #{tpu_custom_call.1} parent=5 // pred_fallthru
        _
      %p197 = scmp.le.s32.totalorder 1, %s22
      %p198 = scmp.lt.s32.totalorder %s22, 3
      %p199 = pnand %p197, %p198
      %p200 = pneg %p199
      // Predicated region
      $region29: #{tpu_custom_call.1} parent=5 // pred_check
        _
      $region30: #{tpu_custom_call.1} parent=5 // pred_check_branch
        %202 = sbr.rel (%p199) target = $region32
      $region31: #{tpu_custom_call.1} parent=5 // pred_region
        %s203 = ssub.s32 %s22, 1
        %s204 = sand.u32 %s56, 1
        %s205 = scalar_lea.sflag [#allocation4], %s204
        %s206 = sand.u32 %s56, 1
        %s207 = smul.addr %s206, 8
        %s208 = scalar_lea.vmem [#allocation3], %s207
        // Predicated region
        $region33: #{tpu_custom_call.1} parent=31 // pred_check
          %p209 = pneg %p69
        $region34: #{tpu_custom_call.1} parent=31 // pred_check_branch
          %211 = sbr.rel (%p209) target = $region36
        $region35: #{tpu_custom_call.1} parent=31 // pred_region
          %213 = dma.done %s205, 128
        $region36: #{tpu_custom_call.1} parent=31 // pred_fallthru
          _
        // Predicated region
        $region37: #{tpu_custom_call.1} parent=31 // pred_check
          %p214 = pneg %p90
        $region38: #{tpu_custom_call.1} parent=31 // pred_check_branch
          %216 = sbr.rel (%p214) target = $region40
        $region39: #{tpu_custom_call.1} parent=31 // pred_region
          %218 = dma.done [#allocation7], 1024
        $region40: #{tpu_custom_call.1} parent=31 // pred_fallthru
          _
        %p219 = pneg %p43
        %p220 = pneg %p40
        %s221 = sand.u32 %s56, 1
        %s222 = scalar_lea.sflag [#allocation4], %s221
        %s223 = sand.u32 %s56, 1
        %s224 = smul.addr %s223, 8
        %s225 = scalar_lea.vmem [#allocation3], %s224
        %p226 = pneg %p69
        %p227 = pneg %p66
        %p228 = pneg %p90
        %p229 = pneg %p87
        %p230 = pneg %p116
        %p231 = pneg %p113
        %s232 = sand.u32 %s103, 1
        %s233 = scalar_lea.sflag [#allocation5], %s232
        %s234 = sand.u32 %s103, 1
        %s235 = smul.addr %s234, 8
        %s236 = scalar_lea.vmem [#allocation8], %s235
        %p237 = pneg %p142
        %p238 = pneg %p139
        %s239 = sand.u32 %s129, 1
        %s240 = scalar_lea.sflag [#allocation10], %s239
        %s241 = sand.u32 %s129, 1
        %s242 = smul.addr %s241, 8
        %s243 = scalar_lea.vmem [#allocation9], %s242
        %v244 = vld [vmem:[%s208] sm:$0xff]
        %s245 = sld [smem:[#allocation2]]
        %s246 = smax.f32 %s245, 0.0
        %v247 = vstv %s246
        %v248 = vmul.f32 %v247, 1.442695
        %v249 = vpow.pop %v248
        %s250 = vtos %v249
        %v251 = vmul.f32 %v244, %v244
        %vm252 = vcmask 523264
        %v253 = vsel %vm252, %v251, 0.0
        %254 = vadd.xlane.f32.xlu0 %v253
        %v255 = vpop.xlane.xlu0 %254
        %v256 = vmax.f32 %v255, 1e-24
        %v257 = vrsqrt.pop %v256
        %v258 = vmul.f32 %v257, %v256
        %v259 = vmul.f32 %v258, %v257
        %v260 = vmul.f32 0.5, %v259
        %v261 = vsub.f32 1.5, %v260
        %v262 = vmul.f32 %v257, %v261
        %vm263 = vweird.f32 %v256
        %vm264 = vweird.f32 %v257
        %vm265 = vmor %vm263, %vm264
        %v266 = vsel %vm265, %v257, %v262
        %v267 = vstv %s250
        %v268 = vmul.f32 %v267, %v266
        %v269 = vmul.f32 %v268, %v244
        %270 = vst.msk [vmem:[%s236] sm:$0xff] %vm252, %v269
        %v271 = vld [vmem:[%s236] sm:$0xff]
        %v272 = vld [vmem:[#allocation6] sm:$0xff]
        %v273 = vld [vmem:[#allocation6 + $0x8] sm:$0xff]
        %v274 = vld [vmem:[#allocation6 + $0x10] sm:$0xff]
        %v275 = vld [vmem:[#allocation6 + $0x18] sm:$0xff]
        %v276 = vld [vmem:[#allocation6 + $0x20] sm:$0xff]
        %v277 = vld [vmem:[#allocation6 + $0x28] sm:$0xff]
        %v278 = vld [vmem:[#allocation6 + $0x30] sm:$0xff]
        %v279 = vld [vmem:[#allocation6 + $0x38] sm:$0xff]
        %v281 = vsel %vm252, %v271, 0
        %283 = vmatpush.msra.mxu0 0.0
        %284 = vmatpush.msra.mxu0 0.0
        %285 = vmatpush.msra.mxu0 0.0
        %286 = vmatpush.msra.mxu0 0.0
        %287 = vmatpush.msra.mxu0 0.0
        %288 = vmatpush.msra.mxu0 0.0
        %289 = vmatpush.msra.mxu0 0.0
        %290 = vmatpush.msra.mxu0 0.0
        %291 = vmatpush.msra.mxu0 %v279
        %292 = vmatpush.msra.mxu0 %v278
        %293 = vmatpush.msra.mxu0 %v277
        %294 = vmatpush.msra.mxu0 %v276
        %295 = vmatpush.msra.mxu0 %v275
        %296 = vmatpush.msra.mxu0 %v274
        %297 = vmatpush.msra.mxu0 %v273
        %298 = vmatpush.msra.mxu0 %v272
        %299 = vmatmul.f32.gmra.mxu0 %v281
        %v300 = vpop.f32.mrf.mxu0
        %v301 = vadd.f32 0.0, %v300
        %302 = vdwg.mxu0
        %303 = vst.msk [vmem:[%s243] sm:$0xff] %vm252, %v301
        %s304 = sand.u32 %s103, 1
        %s305 = scalar_lea.sflag [#allocation5], %s304
        %s306 = sand.u32 %s103, 1
        %s307 = smul.addr %s306, 8
        %s308 = scalar_lea.vmem [#allocation8], %s307
        %s309 = sand.u32 %s129, 1
        %s310 = scalar_lea.sflag [#allocation10], %s309
        %s311 = sand.u32 %s129, 1
        %s312 = smul.addr %s311, 8
        %s313 = scalar_lea.vmem [#allocation9], %s312
        // Predicated region
        $region41: #{tpu_custom_call.1} parent=31 // pred_check
          %p314 = pneg %p113
        $region42: #{tpu_custom_call.1} parent=31 // pred_check_branch
          %316 = sbr.rel (%p314) target = $region44
        $region43: #{tpu_custom_call.1} parent=31 // pred_region
          %318 = vsyncadd %s305, 0
          %s319 = smul.addr %s27, 8
          %s320 = scalar_lea.hbm %s3, %s319
          %s322 = sshll.u32 %s308, 4
          %s323 = int_to_ptr.vmem [resolvable:$true] %s322
          %s324 = sshll.u32 %s320, 4
          %s325 = int_to_ptr.hbm [resolvable:$true] %s324
          %327 = dma.vmem_to_hbm [thread:$0]  %s323, 128, %s325, %s305
        $region44: #{tpu_custom_call.1} parent=31 // pred_fallthru
          _
        // Predicated region
        $region45: #{tpu_custom_call.1} parent=31 // pred_check
          %p328 = pneg %p139
        $region46: #{tpu_custom_call.1} parent=31 // pred_check_branch
          %330 = sbr.rel (%p328) target = $region48
        $region47: #{tpu_custom_call.1} parent=31 // pred_region
          %332 = vsyncadd %s310, 0
          %s333 = smul.addr %s27, 8
          %s334 = scalar_lea.hbm %s4, %s333
          %s336 = sshll.u32 %s313, 4
          %s337 = int_to_ptr.vmem [resolvable:$true] %s336
          %s338 = sshll.u32 %s334, 4
          %s339 = int_to_ptr.hbm [resolvable:$true] %s338
          %341 = dma.vmem_to_hbm [thread:$0]  %s337, 128, %s339, %s310
        $region48: #{tpu_custom_call.1} parent=31 // pred_fallthru
          _
      $region32: #{tpu_custom_call.1} parent=5 // pred_fallthru
        _
      %p342 = scmp.le.s32.totalorder 2, %s22
      // Predicated region
      $region49: #{tpu_custom_call.1} parent=5 // pred_check
        %p343 = pneg %p342
      $region50: #{tpu_custom_call.1} parent=5 // pred_check_branch
        %345 = sbr.rel (%p343) target = $region52
      $region51: #{tpu_custom_call.1} parent=5 // pred_region
        %s346 = ssub.s32 %s22, 2
        // Predicated region
        $region53: #{tpu_custom_call.1} parent=51 // pred_check
          %p347 = pneg %p119
        $region54: #{tpu_custom_call.1} parent=51 // pred_check_branch
          %349 = sbr.rel (%p347) target = $region56
        $region55: #{tpu_custom_call.1} parent=51 // pred_region
          %s350 = sand.u32 %s104, 1
          %s351 = scalar_lea.sflag [#allocation5], %s350
          %s352 = sand.u32 %s104, 1
          %s353 = smul.addr %s352, 8
          %s354 = scalar_lea.vmem [#allocation8], %s353
          %356 = dma.done %s351, 128
        $region56: #{tpu_custom_call.1} parent=51 // pred_fallthru
          _
        // Predicated region
        $region57: #{tpu_custom_call.1} parent=51 // pred_check
          %p357 = pneg %p145
        $region58: #{tpu_custom_call.1} parent=51 // pred_check_branch
          %359 = sbr.rel (%p357) target = $region60
        $region59: #{tpu_custom_call.1} parent=51 // pred_region
          %s360 = sand.u32 %s130, 1
          %s361 = scalar_lea.sflag [#allocation10], %s360
          %s362 = sand.u32 %s130, 1
          %s363 = smul.addr %s362, 8
          %s364 = scalar_lea.vmem [#allocation9], %s363
          %366 = dma.done %s361, 128
        $region60: #{tpu_custom_call.1} parent=51 // pred_fallthru
          _
      $region52: #{tpu_custom_call.1} parent=5 // pred_fallthru
        _
    $region6: #{tpu_custom_call.1} parent=1 // loop_footer
      %s26 = sadd.s32 1, %s22
    $region7: #{tpu_custom_call.1} parent=1 // loop_footer_branch
      %21 = sbr.rel target = $region3
    $region8: #{tpu_custom_call.1} parent=1 // loop_exit
      _
    %367 = vsyncpa [#allocation4], 1
    %s368 = scalar_lea.sflag [#allocation4], 1
    %369 = vsyncpa %s368, 1
    %370 = vsyncpa [#allocation7], 1
    %371 = vsyncpa [#allocation5], 1
    %s372 = scalar_lea.sflag [#allocation5], 1
    %373 = vsyncpa %s372, 1
    %374 = vsyncpa [#allocation10], 1
    %s375 = scalar_lea.sflag [#allocation10], 1
    %376 = vsyncpa %s375, 1

// kernel: tpu_custom_call.1
$region0: #{tpu_custom_call.1}
  #allocation0 [shape = 'u32[]', space=smem, size = 0x4, offset = 0x4, fixed_abs, tag = 'smem constant byte address 0x4 - core index']
  #allocation1 [shape = 'u32[72,128]{1,0:T(1,128)}', space=vmem, size = 0x9000, scoped, tag = 'internal scratch']
  #allocation2 [shape = 'f32[1]{0:T(128)S(6)}', space=smem, size = 0x200, scoped, tag = 'scoped memory for tpu_custom_call.1']
  %s0 = inlined_call_operand.<no memory space> [shape: f32[1], index: 0, kind: input, shape index: {}]
  %s1 = inlined_call_operand.hbm [shape: f32[16,64], index: 1, kind: input, shape index: {}]
  %s2 = inlined_call_operand.hbm [shape: f32[64,64], index: 2, kind: input, shape index: {}]
  %s3 = inlined_call_operand.hbm [shape: f32[16,64], index: 3, kind: output, shape index: {0}]
  %s4 = inlined_call_operand.hbm [shape: f32[16,64], index: 4, kind: output, shape index: {1}]
  %5 = xla_tuple %s3, %s4
  %s6 = sld [smem:[#allocation0]]
  $region61: #{tpu_custom_call.1} parent=0
    _
  %s8 = ssub.s32 1, %s6
  %s9 = scalar_select 0, %s8, %s6
  %10 = sst [smem:[#allocation2]] %s0
  $region1: #{tpu_custom_call.1} parent=0
    #allocation3 [shape = 'u8[8192]{0}', space=vmem, size = 0x2000, scoped, tag = 'input window, operand 1']
    #allocation4 [shape = 's32[2]{0}', space=sflag, size = 0x8, scoped, tag = 'scoped memory for tpu_custom_call.1']
    #allocation5 [shape = 's32[2]{0}', space=sflag, size = 0x8, scoped, tag = 'scoped memory for tpu_custom_call.1']
    #allocation6 [shape = 'u8[32768]{0}', space=vmem, size = 0x8000, scoped, tag = 'input window, operand 2, single buffered']
    #allocation7 [shape = 's32[1]{0}', space=sflag, size = 0x4, scoped, tag = 'scoped memory for tpu_custom_call.1']
    #allocation8 [shape = 'u8[8192]{0}', space=vmem, size = 0x2000, scoped, tag = 'output window, operand 0']
    #allocation9 [shape = 'u8[8192]{0}', space=vmem, size = 0x2000, scoped, tag = 'output window, operand 1']
    #allocation10 [shape = 's32[2]{0}', space=sflag, size = 0x8, scoped, tag = 'scoped memory for tpu_custom_call.1']
    %11 = vsyncpa [#allocation4], 0
    %s12 = scalar_lea.sflag [#allocation4], 1
    %13 = vsyncpa %s12, 0
    %14 = vsyncpa [#allocation7], 0
    %15 = vsyncpa [#allocation5], 0
    %s16 = scalar_lea.sflag [#allocation5], 1
    %17 = vsyncpa %s16, 0
    %18 = vsyncpa [#allocation10], 0
    %s19 = scalar_lea.sflag [#allocation10], 1
    %20 = vsyncpa %s19, 0
    loop: start=0, step=1, limit=4
    $region2: #{tpu_custom_call.1} parent=1 // loop_pre_header
      _
    $region3: #{tpu_custom_call.1} parent=1 // loop_header
      %s22 = sphi 0, %s26
      %p23 = scmp.ge.s32.totalorder %s22, 4
      %s30 = sphi 0, %s30
      %s32 = sphi 0, %s30
      %s33 = sphi 0, %s32
      %s47 = sphi 0, %s33
      %s53 = sphi 0, %s55
      %s56 = sphi 0, %s53
      %s57 = sphi 0, %s56
      %s73 = sphi 0, %s57
      %s77 = sphi 0, %s77
      %s79 = sphi 0, %s77
      %s80 = sphi 0, %s79
      %s94 = sphi 0, %s80
      %s100 = sphi 0, %s102
      %s103 = sphi 0, %s100
      %s104 = sphi 0, %s103
      %s120 = sphi 0, %s104
      %s126 = sphi 0, %s128
      %s129 = sphi 0, %s126
      %s130 = sphi 0, %s129
      %s146 = sphi 0, %s130
    $region4: #{tpu_custom_call.1} parent=1 // loop_header_branch
      %25 = sbr.rel (%p23) target = $region8
    $region5: #{tpu_custom_call.1} parent=1 // loop_body
      %s27 = ssub.s32 %s22, 1
      %s28 = ssub.s32 %s22, 2
      %s29 = sadd.s32 %s22, 1
      %s31 = sadd.s32 %s30, 1
      %p34 = scmp.eq.s32.totalorder %s22, 1
      %p35 = scmp.ne.s32.totalorder %s30, %s32
      %p36 = scmp.eq.s32.totalorder %s22, 0
      %p37 = por %p35, %p36
      %p38 = scmp.ne.s32.totalorder %s30, %s32
      %p39 = scmp.eq.s32.totalorder %s27, 1
      %p40 = por %p38, %p39
      %p41 = scmp.ne.s32.totalorder %s32, %s33
      %p42 = scmp.eq.s32.totalorder %s27, 0
      %p43 = por %p41, %p42
      %p44 = scmp.ne.s32.totalorder %s32, %s33
      %p45 = scmp.eq.s32.totalorder %s28, 1
      %p46 = por %p44, %p45
      %p48 = scmp.ne.s32.totalorder %s33, %s47
      %p49 = scmp.eq.s32.totalorder %s28, 0
      %p50 = por %p48, %p49
      %s51 = ssub.s32 %s22, %s29
      %p52 = scmp.eq.s32.totalorder %s51, 0
      %s54 = sadd.s32 %s53, 1
      %s55 = scalar_select %p52, %s53, %s54
      %p58 = pneg %p52
      %p59 = scmp.eq.s32.totalorder %s22, 1
      %p60 = por %p58, %p59
      %p61 = scmp.ne.s32.totalorder %s53, %s56
      %p62 = scmp.eq.s32.totalorder %s22, 0
      %p63 = por %p61, %p62
      %p64 = scmp.ne.s32.totalorder %s53, %s56
      %p65 = scmp.eq.s32.totalorder %s27, 1
      %p66 = por %p64, %p65
      %p67 = scmp.ne.s32.totalorder %s56, %s57
      %p68 = scmp.eq.s32.totalorder %s27, 0
      %p69 = por %p67, %p68
      %p70 = scmp.ne.s32.totalorder %s56, %s57
      %p71 = scmp.eq.s32.totalorder %s28, 1
      %p72 = por %p70, %p71
      %p74 = scmp.ne.s32.totalorder %s57, %s73
      %p75 = scmp.eq.s32.totalorder %s28, 0
      %p76 = por %p74, %p75
      %s78 = sadd.s32 %s77, 1
      %p81 = scmp.eq.s32.totalorder %s22, 1
      %p82 = scmp.ne.s32.totalorder %s77, %s79
      %p83 = scmp.eq.s32.totalorder %s22, 0
      %p84 = por %p82, %p83
      %p85 = scmp.ne.s32.totalorder %s77, %s79
      %p86 = scmp.eq.s32.totalorder %s27, 1
      %p87 = por %p85, %p86
      %p88 = scmp.ne.s32.totalorder %s79, %s80
      %p89 = scmp.eq.s32.totalorder %s27, 0
      %p90 = por %p88, %p89
      %p91 = scmp.ne.s32.totalorder %s79, %s80
      %p92 = scmp.eq.s32.totalorder %s28, 1
      %p93 = por %p91, %p92
      %p95 = scmp.ne.s32.totalorder %s80, %s94
      %p96 = scmp.eq.s32.totalorder %s28, 0
      %p97 = por %p95, %p96
      %s98 = ssub.s32 %s22, %s29
      %p99 = scmp.eq.s32.totalorder %s98, 0
      %s101 = sadd.s32 %s100, 1
      %s102 = scalar_select %p99, %s100, %s101
      %p105 = pneg %p99
      %p106 = scmp.eq.s32.totalorder %s22, 1
      %p107 = por %p105, %p106
      %p108 = scmp.ne.s32.totalorder %s100, %s103
      %p109 = scmp.eq.s32.totalorder %s22, 0
      %p110 = por %p108, %p109
      %p111 = scmp.ne.s32.totalorder %s100, %s103
      %p112 = scmp.eq.s32.totalorder %s27, 1
      %p113 = por %p111, %p112
      %p114 = scmp.ne.s32.totalorder %s103, %s104
      %p115 = scmp.eq.s32.totalorder %s27, 0
      %p116 = por %p114, %p115
      %p117 = scmp.ne.s32.totalorder %s103, %s104
      %p118 = scmp.eq.s32.totalorder %s28, 1
      %p119 = por %p117, %p118
      %p121 = scmp.ne.s32.totalorder %s104, %s120
      %p122 = scmp.eq.s32.totalorder %s28, 0
      %p123 = por %p121, %p122
      %s124 = ssub.s32 %s22, %s29
      %p125 = scmp.eq.s32.totalorder %s124, 0
      %s127 = sadd.s32 %s126, 1
      %s128 = scalar_select %p125, %s126, %s127
      %p131 = pneg %p125
      %p132 = scmp.eq.s32.totalorder %s22, 1
      %p133 = por %p131, %p132
      %p134 = scmp.ne.s32.totalorder %s126, %s129
      %p135 = scmp.eq.s32.totalorder %s22, 0
      %p136 = por %p134, %p135
      %p137 = scmp.ne.s32.totalorder %s126, %s129
      %p138 = scmp.eq.s32.totalorder %s27, 1
      %p139 = por %p137, %p138
      %p140 = scmp.ne.s32.totalorder %s129, %s130
      %p141 = scmp.eq.s32.totalorder %s27, 0
      %p142 = por %p140, %p141
      %p143 = scmp.ne.s32.totalorder %s129, %s130
      %p144 = scmp.eq.s32.totalorder %s28, 1
      %p145 = por %p143, %p144
      %p147 = scmp.ne.s32.totalorder %s130, %s146
      %p148 = scmp.eq.s32.totalorder %s28, 0
      %p149 = por %p147, %p148
      %p150 = scmp.le.s32.totalorder 1, %s22
      %p151 = scmp.lt.s32.totalorder %s22, 3
      %p152 = pnand %p150, %p151
      %p153 = pneg %p152
      // Predicated region
      $region9: #{tpu_custom_call.1} parent=5 // pred_check
        _
      $region10: #{tpu_custom_call.1} parent=5 // pred_check_branch
        %155 = sbr.rel (%p152) target = $region12
      $region11: #{tpu_custom_call.1} parent=5 // pred_region
        %s156 = ssub.s32 %s22, 1
        // Predicated region
        $region13: #{tpu_custom_call.1} parent=11 // pred_check
          %p157 = pneg %p43
        $region14: #{tpu_custom_call.1} parent=11 // pred_check_branch
          %159 = sbr.rel (%p157) target = $region16
        $region15: #{tpu_custom_call.1} parent=11 // pred_region
          _
        $region16: #{tpu_custom_call.1} parent=11 // pred_fallthru
          _
        // Predicated region
        $region17: #{tpu_custom_call.1} parent=11 // pred_check
          %p160 = pneg %p90
        $region18: #{tpu_custom_call.1} parent=11 // pred_check_branch
          %162 = sbr.rel (%p160) target = $region20
        $region19: #{tpu_custom_call.1} parent=11 // pred_region
          %164 = vsyncadd [#allocation7], 0
          %s165 = sshll.u32 %s2, 4
          %s166 = int_to_ptr.hbm [resolvable:$true] %s165
          %s167 = sshll.u32 [#allocation6], 4
          %s168 = int_to_ptr.vmem [resolvable:$true] %s167
          %173 = dma.hbm_to_vmem [thread:$0]  %s166, 1024, %s168, [#allocation7], 128, 128, 8
        $region20: #{tpu_custom_call.1} parent=11 // pred_fallthru
          _
      $region12: #{tpu_custom_call.1} parent=5 // pred_fallthru
        _
      %p174 = scmp.lt.s32.totalorder %s22, 2
      // Predicated region
      $region21: #{tpu_custom_call.1} parent=5 // pred_check
        %p175 = pneg %p174
      $region22: #{tpu_custom_call.1} parent=5 // pred_check_branch
        %177 = sbr.rel (%p175) target = $region24
      $region23: #{tpu_custom_call.1} parent=5 // pred_region
        // Predicated region
        $region25: #{tpu_custom_call.1} parent=23 // pred_check
          %p178 = pneg %p63
        $region26: #{tpu_custom_call.1} parent=23 // pred_check_branch
          %180 = sbr.rel (%p178) target = $region28
        $region27: #{tpu_custom_call.1} parent=23 // pred_region
          %s181 = sand.u32 %s53, 1
          %s182 = scalar_lea.sflag [#allocation4], %s181
          %s183 = sand.u32 %s53, 1
          %s184 = smul.addr %s183, 8
          %s185 = scalar_lea.vmem [#allocation3], %s184
          %187 = vsyncadd %s182, 0
          %s188 = smul.addr %s22, 8
          %s189 = scalar_lea.hbm %s1, %s188
          %s191 = sshll.u32 %s189, 4
          %s192 = int_to_ptr.hbm [resolvable:$true] %s191
          %s193 = sshll.u32 %s185, 4
          %s194 = int_to_ptr.vmem [resolvable:$true] %s193
          %196 = dma.hbm_to_vmem [thread:$0]  %s192, 128, %s194, %s182
        $region28: #{tpu_custom_call.1} parent=23 // pred_fallthru
          _
      $region24: #{tpu_custom_call.1} parent=5 // pred_fallthru
        _
      %p197 = scmp.le.s32.totalorder 1, %s22
      %p198 = scmp.lt.s32.totalorder %s22, 3
      %p199 = pnand %p197, %p198
      %p200 = pneg %p199
      // Predicated region
      $region29: #{tpu_custom_call.1} parent=5 // pred_check
        _
      $region30: #{tpu_custom_call.1} parent=5 // pred_check_branch
        %202 = sbr.rel (%p199) target = $region32
      $region31: #{tpu_custom_call.1} parent=5 // pred_region
        %s203 = ssub.s32 %s22, 1
        %s204 = sand.u32 %s56, 1
        %s205 = scalar_lea.sflag [#allocation4], %s204
        %s206 = sand.u32 %s56, 1
        %s207 = smul.addr %s206, 8
        %s208 = scalar_lea.vmem [#allocation3], %s207
        // Predicated region
        $region33: #{tpu_custom_call.1} parent=31 // pred_check
          %p209 = pneg %p69
        $region34: #{tpu_custom_call.1} parent=31 // pred_check_branch
          %211 = sbr.rel (%p209) target = $region36
        $region35: #{tpu_custom_call.1} parent=31 // pred_region
          %213 = dma.done %s205, 128
        $region36: #{tpu_custom_call.1} parent=31 // pred_fallthru
          _
        // Predicated region
        $region37: #{tpu_custom_call.1} parent=31 // pred_check
          %p214 = pneg %p90
        $region38: #{tpu_custom_call.1} parent=31 // pred_check_branch
          %216 = sbr.rel (%p214) target = $region40
        $region39: #{tpu_custom_call.1} parent=31 // pred_region
          %218 = dma.done [#allocation7], 1024
        $region40: #{tpu_custom_call.1} parent=31 // pred_fallthru
          _
        %p219 = pneg %p43
        %p220 = pneg %p40
        %s221 = sand.u32 %s56, 1
        %s222 = scalar_lea.sflag [#allocation4], %s221
        %s223 = sand.u32 %s56, 1
        %s224 = smul.addr %s223, 8
        %s225 = scalar_lea.vmem [#allocation3], %s224
        %p226 = pneg %p69
        %p227 = pneg %p66
        %p228 = pneg %p90
        %p229 = pneg %p87
        %p230 = pneg %p116
        %p231 = pneg %p113
        %s232 = sand.u32 %s103, 1
        %s233 = scalar_lea.sflag [#allocation5], %s232
        %s234 = sand.u32 %s103, 1
        %s235 = smul.addr %s234, 8
        %s236 = scalar_lea.vmem [#allocation8], %s235
        %p237 = pneg %p142
        %p238 = pneg %p139
        %s239 = sand.u32 %s129, 1
        %s240 = scalar_lea.sflag [#allocation10], %s239
        %s241 = sand.u32 %s129, 1
        %s242 = smul.addr %s241, 8
        %s243 = scalar_lea.vmem [#allocation9], %s242
        %v244 = vld [vmem:[%s208] sm:$0xff]
        %s245 = sld [smem:[#allocation2]]
        %s246 = smax.f32 %s245, 0.0
        %v247 = vstv %s246
        %v248 = vmul.f32 %v247, 1.442695
        %v249 = vpow.pop %v248
        %s250 = vtos %v249
        %v251 = vmul.f32 %v244, %v244
        %vm252 = vcmask 523264
        %v253 = vsel %vm252, %v251, 0.0
        %254 = vadd.xlane.f32.xlu0 %v253
        %v255 = vpop.xlane.xlu0 %254
        %v256 = vmax.f32 %v255, 1e-24
        %v257 = vrsqrt.pop %v256
        %v258 = vmul.f32 %v257, %v256
        %v259 = vmul.f32 %v258, %v257
        %v260 = vmul.f32 0.5, %v259
        %v261 = vsub.f32 1.5, %v260
        %v262 = vmul.f32 %v257, %v261
        %vm263 = vweird.f32 %v256
        %vm264 = vweird.f32 %v257
        %vm265 = vmor %vm263, %vm264
        %v266 = vsel %vm265, %v257, %v262
        %v267 = vstv %s250
        %v268 = vmul.f32 %v267, %v266
        %v269 = vmul.f32 %v268, %v244
        %270 = vst.msk [vmem:[%s236] sm:$0xff] %vm252, %v269
        %v271 = vld [vmem:[%s236] sm:$0xff]
        %v272 = vld [vmem:[#allocation6] sm:$0xff]
        %v273 = vld [vmem:[#allocation6 + $0x8] sm:$0xff]
        %v274 = vld [vmem:[#allocation6 + $0x10] sm:$0xff]
        %v275 = vld [vmem:[#allocation6 + $0x18] sm:$0xff]
        %v276 = vld [vmem:[#allocation6 + $0x20] sm:$0xff]
        %v277 = vld [vmem:[#allocation6 + $0x28] sm:$0xff]
        %v278 = vld [vmem:[#allocation6 + $0x30] sm:$0xff]
        %v279 = vld [vmem:[#allocation6 + $0x38] sm:$0xff]
        %v281 = vsel %vm252, %v271, 0
        %283 = vmatpush.msra.mxu0 0.0
        %284 = vmatpush.msra.mxu0 0.0
        %285 = vmatpush.msra.mxu0 0.0
        %286 = vmatpush.msra.mxu0 0.0
        %287 = vmatpush.msra.mxu0 0.0
        %288 = vmatpush.msra.mxu0 0.0
        %289 = vmatpush.msra.mxu0 0.0
        %290 = vmatpush.msra.mxu0 0.0
        %291 = vmatpush.msra.mxu0 %v279
        %292 = vmatpush.msra.mxu0 %v278
        %293 = vmatpush.msra.mxu0 %v277
        %294 = vmatpush.msra.mxu0 %v276
        %295 = vmatpush.msra.mxu0 %v275
        %296 = vmatpush.msra.mxu0 %v274
        %297 = vmatpush.msra.mxu0 %v273
        %298 = vmatpush.msra.mxu0 %v272
        %299 = vmatmul.f32.gmra.mxu0 %v281
        %v300 = vpop.f32.mrf.mxu0
        %v301 = vadd.f32 0.0, %v300
        %302 = vdwg.mxu0
        %303 = vst.msk [vmem:[%s243] sm:$0xff] %vm252, %v301
        %s304 = sand.u32 %s103, 1
        %s305 = scalar_lea.sflag [#allocation5], %s304
        %s306 = sand.u32 %s103, 1
        %s307 = smul.addr %s306, 8
        %s308 = scalar_lea.vmem [#allocation8], %s307
        %s309 = sand.u32 %s129, 1
        %s310 = scalar_lea.sflag [#allocation10], %s309
        %s311 = sand.u32 %s129, 1
        %s312 = smul.addr %s311, 8
        %s313 = scalar_lea.vmem [#allocation9], %s312
        // Predicated region
        $region41: #{tpu_custom_call.1} parent=31 // pred_check
          %p314 = pneg %p113
        $region42: #{tpu_custom_call.1} parent=31 // pred_check_branch
          %316 = sbr.rel (%p314) target = $region44
        $region43: #{tpu_custom_call.1} parent=31 // pred_region
          %318 = vsyncadd %s305, 0
          %s319 = smul.addr %s27, 8
          %s320 = scalar_lea.hbm %s3, %s319
          %s322 = sshll.u32 %s308, 4
          %s323 = int_to_ptr.vmem [resolvable:$true] %s322
          %s324 = sshll.u32 %s320, 4
          %s325 = int_to_ptr.hbm [resolvable:$true] %s324
          %327 = dma.vmem_to_hbm [thread:$0]  %s323, 128, %s325, %s305
        $region44: #{tpu_custom_call.1} parent=31 // pred_fallthru
          _
        // Predicated region
        $region45: #{tpu_custom_call.1} parent=31 // pred_check
          %p328 = pneg %p139
        $region46: #{tpu_custom_call.1} parent=31 // pred_check_branch
          %330 = sbr.rel (%p328) target = $region48
        $region47: #{tpu_custom_call.1} parent=31 // pred_region
          %332 = vsyncadd %s310, 0
          %s333 = smul.addr %s27, 8
          %s334 = scalar_lea.hbm %s4, %s333
          %s336 = sshll.u32 %s313, 4
          %s337 = int_to_ptr.vmem [resolvable:$true] %s336
          %s338 = sshll.u32 %s334, 4
          %s339 = int_to_ptr.hbm [resolvable:$true] %s338
          %341 = dma.vmem_to_hbm [thread:$0]  %s337, 128, %s339, %s310
        $region48: #{tpu_custom_call.1} parent=31 // pred_fallthru
          _
      $region32: #{tpu_custom_call.1} parent=5 // pred_fallthru
        _
      %p342 = scmp.le.s32.totalorder 2, %s22
      // Predicated region
      $region49: #{tpu_custom_call.1} parent=5 // pred_check
        %p343 = pneg %p342
      $region50: #{tpu_custom_call.1} parent=5 // pred_check_branch
        %345 = sbr.rel (%p343) target = $region52
      $region51: #{tpu_custom_call.1} parent=5 // pred_region
        %s346 = ssub.s32 %s22, 2
        // Predicated region
        $region53: #{tpu_custom_call.1} parent=51 // pred_check
          %p347 = pneg %p119
        $region54: #{tpu_custom_call.1} parent=51 // pred_check_branch
          %349 = sbr.rel (%p347) target = $region56
        $region55: #{tpu_custom_call.1} parent=51 // pred_region
          %s350 = sand.u32 %s104, 1
          %s351 = scalar_lea.sflag [#allocation5], %s350
          %s352 = sand.u32 %s104, 1
          %s353 = smul.addr %s352, 8
          %s354 = scalar_lea.vmem [#allocation8], %s353
          %356 = dma.done %s351, 128
        $region56: #{tpu_custom_call.1} parent=51 // pred_fallthru
          _
        // Predicated region
        $region57: #{tpu_custom_call.1} parent=51 // pred_check
          %p357 = pneg %p145
        $region58: #{tpu_custom_call.1} parent=51 // pred_check_branch
          %359 = sbr.rel (%p357) target = $region60
        $region59: #{tpu_custom_call.1} parent=51 // pred_region
          %s360 = sand.u32 %s130, 1
          %s361 = scalar_lea.sflag [#allocation10], %s360
          %s362 = sand.u32 %s130, 1
          %s363 = smul.addr %s362, 8
          %s364 = scalar_lea.vmem [#allocation9], %s363
          %366 = dma.done %s361, 128
        $region60: #{tpu_custom_call.1} parent=51 // pred_fallthru
          _
      $region52: #{tpu_custom_call.1} parent=5 // pred_fallthru
        _
    $region6: #{tpu_custom_call.1} parent=1 // loop_footer
      %s26 = sadd.s32 1, %s22
    $region7: #{tpu_custom_call.1} parent=1 // loop_footer_branch
      %21 = sbr.rel target = $region3
    $region8: #{tpu_custom_call.1} parent=1 // loop_exit
      _
    %367 = vsyncpa [#allocation4], 1
    %s368 = scalar_lea.sflag [#allocation4], 1
    %369 = vsyncpa %s368, 1
    %370 = vsyncpa [#allocation7], 1
    %371 = vsyncpa [#allocation5], 1
    %s372 = scalar_lea.sflag [#allocation5], 1
    %373 = vsyncpa %s372, 1
    %374 = vsyncpa [#allocation10], 1
    %s375 = scalar_lea.sflag [#allocation10], 1
    %376 = vsyncpa %s375, 1

</llo_original>
